<compile_context>
chip_gen: v7x
topology: tpu7x:2x2x1
jax: 0.10.0
libtpu: 0.0.40
codegen_flags: <defaults>
</compile_context>

<pallas_src>
import jax
import jax.numpy as jnp
from jax.experimental import pallas as pl
from jax.experimental.pallas import tpu as pltpu


def _identity_kernel(x_ref, o_ref):
    # Pure pass-through copy of the current tile. No extra elementwise work.
    o_ref[...] = x_ref[...]


def _lane_dense_2d(total: int) -> tuple[int, int]:
    """Factor `total` into (rows, cols) with cols a multiple of 128 if possible."""
    for cols in (1024, 512, 256, 128):
        if total % cols == 0:
            return total // cols, cols
    # Fallback: one full row; the block then equals the full array (legal even
    # when not (8,128)-divisible).
    return 1, total


def _pick_block_rows(rows: int, cols: int, itemsize: int) -> int:
    """Largest power-of-two multiple of 8 dividing `rows`, capped near ~2 MiB/tile."""
    target_rows = max(8, (2 * 1024 * 1024) // max(1, cols * itemsize))
    best = None
    r = 8
    while r <= rows and r <= target_rows:
        if rows % r == 0:
            best = r
        r *= 2
    return best if best is not None else rows  # full rows (block == array dim)


def identity_forward(x: jax.Array) -> jax.Array:
    """Identity forward pass (y = x) as a tiled, aliased Pallas TPU copy.

    NOTE: in a real model this layer should just `return x`; the kernel below
    exists to express Identity in Pallas with the minimum possible cost.
    """
    orig_shape = x.shape
    total = x.size
    if total == 0:
        return x  # nothing to copy

    rows, cols = _lane_dense_2d(total)
    x2 = x.reshape(rows, cols)  # row-major reshape, no relayout / extra HBM traffic

    block_rows = _pick_block_rows(rows, cols, x2.dtype.itemsize)
    grid = (rows // block_rows,)

    out2 = pl.pallas_call(
        _identity_kernel,
        out_shape=jax.ShapeDtypeStruct(x2.shape, x2.dtype),
        grid=grid,
        in_specs=[pl.BlockSpec((block_rows, cols), lambda i: (i, 0))],
        out_specs=pl.BlockSpec((block_rows, cols), lambda i: (i, 0)),
        input_output_aliases={0: 0},  # reuse the input HBM buffer for the output
        compiler_params=pltpu.CompilerParams(
            dimension_semantics=("parallel",),  # independent tiles; TC-shardable on v7x
            vmem_limit_bytes=32 * 1024 * 1024,
        ),
    )(x2)

    return out2.reshape(orig_shape)


if __name__ == "__main__":
    key = jax.random.PRNGKey(0)
    # Small NCHW input consistent with how Identity is used (feature maps).
    x = jax.random.normal(key, (2, 4, 16, 16), dtype=jnp.float32)

    fwd = jax.jit(identity_forward)
    y = fwd(x)
    jax.block_until_ready(y)

    assert y.shape == x.shape, (y.shape, x.shape)
    assert y.dtype == x.dtype, (y.dtype, x.dtype)
    assert bool(jnp.all(y == x)), "identity output mismatch"

    print("KERNEL_OK")
</pallas_src>

<mosaic_0001>
module attributes {stable_mosaic.version = 11 : i64} {
  func.func @_identity_kernel(%arg0: i32, %arg1: memref<2x1024xf32, #tpu.memory_space<vmem>>, %arg2: memref<2x1024xf32, #tpu.memory_space<vmem>>) attributes {dimension_semantics = [#tpu.dimension_semantics<parallel>], iteration_bounds = array<i64: 1>, scalar_prefetch = 0 : i64, scratch_operands = 0 : i64, tpu.core_type = #tpu.core_type<tc>, window_params = [{transform_indices = @transform_0, window_bounds = array<i64: 2, 1024>}, {transform_indices = @transform_1, window_bounds = array<i64: 2, 1024>}]} {
    %c0 = arith.constant 0 : index
    %c0_0 = arith.constant 0 : index
    %0 = vector.load %arg1[%c0, %c0_0] : memref<2x1024xf32, #tpu.memory_space<vmem>>, vector<2x1024xf32>
    %c0_1 = arith.constant 0 : index
    %c0_2 = arith.constant 0 : index
    %1 = vector.load %arg2[%c0_1, %c0_2] : memref<2x1024xf32, #tpu.memory_space<vmem>>, vector<2x1024xf32>
    tpu.vector_store %arg2[%c0_1, %c0_2], %0 {strides = array<i32>} : memref<2x1024xf32, #tpu.memory_space<vmem>>, vector<2x1024xf32>,
    return
  }
  func.func @transform_0(%arg0: i32) -> (i32, i32) {
    %c0_i32 = arith.constant 0 : i32
    %c0_i32_0 = arith.constant 0 : i32
    return %arg0, %c0_i32 : i32, i32
  }
  func.func @transform_1(%arg0: i32) -> (i32, i32) {
    %c0_i32 = arith.constant 0 : i32
    %c0_i32_0 = arith.constant 0 : i32
    return %arg0, %c0_i32 : i32, i32
  }
}

</mosaic_0001>

<llo_original>
// kernel: identity_forward.1
$region0: #{identity_forward.1}
  #allocation0 [shape = 'u32[]', space=smem, size = 0x4, offset = 0x4, fixed_abs, tag = 'smem constant byte address 0x4 - core index']
  #allocation1 [shape = 'u32[144,128]{1,0:T(1,128)}', space=vmem, size = 0x12000, scoped, tag = 'internal scratch']
  %s0 = inlined_call_operand.vmem [shape: f32[2,1024], index: 0, kind: input, shape index: {}, may-alias: {0,1}]
  %s1 = inlined_call_operand.vmem [shape: f32[2,1024], index: 1, kind: output, shape index: {}, may-alias: {0,1}]
  %s2 = sld [smem:[#allocation0]]
  $region14: #{identity_forward.1} parent=0
    _
  %s4 = ssub.s32 1, %s2
  %s5 = scalar_select 0, %s4, %s2
  // Predicated region
  $region2: #{identity_forward.1} parent=0 // pred_check
    _
  $region3: #{identity_forward.1} parent=0 // pred_check_branch
    %7 = sbr.rel (0) target = $region5
  $region4: #{identity_forward.1} parent=0 // pred_region
    _
  $region5: #{identity_forward.1} parent=0 // pred_fallthru
    _
  %v8 = vld [vmem:[%s0] sm:$0xff]
  %v9 = vld [vmem:[%s0 + $0x8] sm:$0xff]
  %10 = vst [vmem:[%s1] sm:$0xff] %v8
  %11 = vst [vmem:[%s1 + $0x8] sm:$0xff] %v9
  // Predicated region
  $region6: #{identity_forward.1} parent=0 // pred_check
    _
  $region7: #{identity_forward.1} parent=0 // pred_check_branch
    %13 = sbr.rel (0) target = $region9
  $region8: #{identity_forward.1} parent=0 // pred_region
    _
  $region9: #{identity_forward.1} parent=0 // pred_fallthru
    _
  // Predicated region
  $region10: #{identity_forward.1} parent=0 // pred_check
    _
  $region11: #{identity_forward.1} parent=0 // pred_check_branch
    %15 = sbr.rel (0) target = $region13
  $region12: #{identity_forward.1} parent=0 // pred_region
    _
  $region13: #{identity_forward.1} parent=0 // pred_fallthru
    _

</llo_original>
